<compile_context>
chip_gen: v7x
topology: tpu7x:2x2x1
jax: 0.10.0
libtpu: 0.0.40
codegen_flags: <defaults>
</compile_context>

<pallas_src>
import functools

import numpy as np
import jax
import jax.numpy as jnp
from jax.experimental import pallas as pl
from jax.experimental.pallas import tpu as pltpu


def _pair(v):
    return tuple(v) if isinstance(v, (tuple, list)) else (v, v)


def _quadruple(v):
    return tuple(v) if isinstance(v, (tuple, list)) else (v, v, v, v)


def _round_up(v, m):
    return -(-v // m) * m


# ------------------ median selection networks (VPU min/max only) ------------------

def _sort3(a, b, c):
    """(min, median, max) of three arrays with 6 min/max ops."""
    mn_ab = jnp.minimum(a, b)
    mx_ab = jnp.maximum(a, b)
    mn = jnp.minimum(mn_ab, c)
    mx = jnp.maximum(mx_ab, c)
    md = jnp.minimum(mx_ab, jnp.maximum(mn_ab, c))
    return mn, md, mx


def _med3(a, b, c):
    """Median of three arrays with 4 min/max ops."""
    return jnp.maximum(jnp.minimum(a, b), jnp.minimum(jnp.maximum(a, b), c))


# ------------------------------------ kernel --------------------------------------

def _median_pool_kernel(x_ref, o_ref, *, kh, kw):
    """Dense (stride-1) kh x kw median field.

    x_ref: (B, Hin, Win) padded (and possibly lane-packed) planes.
    o_ref: (B, Hu, Wu) with Hu <= Hin - kh + 1, Wu = Win - kw + 1.
    """
    x = x_ref[...]
    Hu = o_ref.shape[1]
    Wu = o_ref.shape[2]

    # kw lane-shifted, full-height views: only kw-1 lane shifts, shared by all rows.
    cols = [x[:, :, dx:dx + Wu] for dx in range(kw)]

    if kh == 3 and kw == 3:
        # Classic exact median-of-9 network, reordered: sort over the lane shifts
        # once, then combine with sublane (dy) shifts only.  ~18 min/max total.
        mn, md, mx = _sort3(cols[0], cols[1], cols[2])
        lo = jnp.maximum(jnp.maximum(mn[:, 0:Hu, :], mn[:, 1:1 + Hu, :]),
                         mn[:, 2:2 + Hu, :])
        hi = jnp.minimum(jnp.minimum(mx[:, 0:Hu, :], mx[:, 1:1 + Hu, :]),
                         mx[:, 2:2 + Hu, :])
        mm = _med3(md[:, 0:Hu, :], md[:, 1:1 + Hu, :], md[:, 2:2 + Hu, :])
        o_ref[...] = _med3(lo, mm, hi)
    else:
        # General fallback: odd-even transposition sort of the kh*kw window views.
        # torch.median returns the LOWER middle element, i.e. sorted index (n-1)//2.
        # TODO(synk): replace with a rank-(n-1)//2 partial selection network to cut
        #             min/max ops and live vregs roughly in half for 5x5 windows.
        n = kh * kw
        vals = [c[:, dy:dy + Hu, :] for dy in range(kh) for c in cols]
        for p in range(n):
            for i in range(p % 2, n - 1, 2):
                a, b = vals[i], vals[i + 1]
                vals[i], vals[i + 1] = jnp.minimum(a, b), jnp.maximum(a, b)
        o_ref[...] = vals[(n - 1) // 2]


# -------------------------------- sizing heuristics --------------------------------

def _vmem_capacity_bytes():
    """Per-TensorCore VMEM capacity; conservative fallback (v7x = 64 MiB)."""
    try:
        info = pltpu.get_tpu_info()
        for name in ("vmem_capacity_bytes", "vmem_size_bytes"):
            cap = getattr(info, name, None)
            if cap:
                return int(cap)
    except Exception:
        pass
    return 64 << 20


def _num_tensorcores():
    """Best-effort TensorCore count of the local device (1 on v5e/v6e)."""
    try:
        dev = jax.devices()[0]
        for name in ("num_cores", "core_count"):
            v = getattr(dev, name, None)
            if isinstance(v, int) and v > 0:
                return v
    except Exception:
        pass
    return 1


def _pick_lane_pack(nc, wp):
    """How many planes to pack side-by-side along the 128-lane axis."""
    if wp >= 128:
        return 1
    gmax = -(-128 // wp)                       # ceil(128 / wp)
    best_g, best_planes = 1, nc
    for g in range(2, gmax + 1):
        planes = -(-nc // g) * g               # total planes incl. zero padding
        if planes < best_planes or (planes == best_planes and g > best_g):
            best_g, best_planes = g, planes
    return best_g


def _pick_plane_batch(m, h_in, w_in, h_out, w_out, n_live, itemsize, vmem_cap):
    """Largest divisor of m whose (8,128)-tile-padded working set fits the VMEM
    budget, preferring a TensorCore-balanced step count on multi-core parts."""
    in_b = _round_up(h_in, 8) * _round_up(w_in, 128) * itemsize
    out_b = _round_up(h_out, 8) * _round_up(w_out, 128) * itemsize
    tmp_b = _round_up(h_in, 8) * _round_up(w_out, 128) * itemsize
    # double-buffered input + output blocks + live span-sized temporaries
    per_plane = 2 * in_b + 2 * out_b + n_live * tmp_b
    budget = max(per_plane, vmem_cap // 4)
    bmax = max(1, budget // per_plane)
    feasible = [d for d in range(1, m + 1) if m % d == 0 and d <= bmax]
    if not feasible:
        return 1
    ncores = _num_tensorcores()
    if ncores > 1:
        balanced = [d for d in feasible if (m // d) % ncores == 0]
        if balanced:
            return max(balanced)
    return max(feasible)


# ------------------------------------ wrapper --------------------------------------

def median_pool2d(x, kernel_size=3, stride=1, padding=0, same=False):
    """Exact JAX/Pallas port of MedianPool2d.forward; x is NCHW."""
    kh, kw = _pair(kernel_size)
    sh, sw = _pair(stride)
    N, C, H, W = x.shape

    # Replicates MedianPool2d._padding (padding is (left, right, top, bottom)).
    if same:
        ph = max(kh - sh, 0) if H % sh == 0 else max(kh - H % sh, 0)
        pw = max(kw - sw, 0) if W % sw == 0 else max(kw - W % sw, 0)
        p_l = pw // 2
        p_r = pw - p_l
        p_t = ph // 2
        p_b = ph - p_t
    else:
        p_l, p_r, p_t, p_b = _quadruple(padding)

    # F.pad(..., mode='reflect') over the last two dims (no-op for padding=0).
    if p_l or p_r or p_t or p_b:
        assert p_t < H and p_b < H and p_l < W and p_r < W, \
            "reflect padding must be smaller than the corresponding dimension"
        xp = jnp.pad(x, ((0, 0), (0, 0), (p_t, p_b), (p_l, p_r)), mode="reflect")
    else:
        xp = x
    Hp, Wp = xp.shape[2], xp.shape[3]

    Ho = (Hp - kh) // sh + 1
    Wo = (Wp - kw) // sw + 1
    Hu = Hp - kh + 1                        # dense (stride-1) median rows
    NC = N * C
    xf = xp.reshape(NC, Hp, Wp)

    vmem_cap = _vmem_capacity_bytes()
    itemsize = x.dtype.itemsize

    # Lane-pack G planes side-by-side so the kernel's last dim is ~>= 128 wide.
    G = _pick_lane_pack(NC, Wp)
    if G > 1:
        NCp = _round_up(NC, G)
        if NCp > NC:                        # zero planes; their outputs are discarded
            xf = jnp.pad(xf, ((0, NCp - NC), (0, 0), (0, 0)))
        M = NCp // G
        xpk = xf.reshape(M, G, Hp, Wp).transpose(0, 2, 1, 3).reshape(M, Hp, G * Wp)
        # kw-1 extra columns so every lane shift stays in-bounds; the medians they
        # produce land in the per-plane garbage columns and are dropped on unpack.
        if kw > 1:
            xpk = jnp.pad(xpk, ((0, 0), (0, 0), (0, kw - 1)))
        Win, Wu = G * Wp + kw - 1, G * Wp
    else:
        NCp, M = NC, NC
        xpk = xf
        Win, Wu = Wp, Wp - kw + 1

    n_live = kh * kw + 4
    B = _pick_plane_batch(M, Hp, Win, Hu, Wu, n_live, itemsize, vmem_cap)

    kernel = functools.partial(_median_pool_kernel, kh=kh, kw=kw)
    dense = pl.pallas_call(
        kernel,
        out_shape=jax.ShapeDtypeStruct((M, Hu, Wu), x.dtype),
        grid=(M // B,),
        in_specs=[pl.BlockSpec((B, Hp, Win), lambda i: (i, 0, 0))],
        out_specs=pl.BlockSpec((B, Hu, Wu), lambda i: (i, 0, 0)),
        compiler_params=pltpu.CompilerParams(
            dimension_semantics=("parallel",),
            vmem_limit_bytes=int(min(vmem_cap, 128 << 20) * 3 // 4),
        ),
    )(xpk)

    # Unpack lanes back to planes, then apply the pool stride wrapper-side so the
    # kernel never needs lane-strided slices.
    if G > 1:
        dense = (dense.reshape(M, Hu, G, Wp)
                      .transpose(0, 2, 1, 3)
                      .reshape(NCp, Hu, Wp)[:NC])
    out = dense[:, ::sh, ::sw][:, :Ho, :Wo]
    return out.reshape(N, C, Ho, Wo)


# ----------------------------------- reference -------------------------------------

def _reference_median_pool(x, kernel_size=3, stride=1, padding=0, same=False):
    """Pure NumPy reference mirroring the PyTorch forward (lower median)."""
    kh, kw = _pair(kernel_size)
    sh, sw = _pair(stride)
    N, C, H, W = x.shape
    if same:
        ph = max(kh - sh, 0) if H % sh == 0 else max(kh - H % sh, 0)
        pw = max(kw - sw, 0) if W % sw == 0 else max(kw - W % sw, 0)
        p_l = pw // 2
        p_r = pw - p_l
        p_t = ph // 2
        p_b = ph - p_t
    else:
        p_l, p_r, p_t, p_b = _quadruple(padding)
    xp = np.pad(x, ((0, 0), (0, 0), (p_t, p_b), (p_l, p_r)), mode="reflect")
    Hp, Wp = xp.shape[2], xp.shape[3]
    Ho = (Hp - kh) // sh + 1
    Wo = (Wp - kw) // sw + 1
    out = np.zeros((N, C, Ho, Wo), dtype=x.dtype)
    kk = kh * kw
    for n in range(N):
        for c in range(C):
            for i in range(Ho):
                for j in range(Wo):
                    win = xp[n, c, i * sh:i * sh + kh, j * sw:j * sw + kw]
                    out[n, c, i, j] = np.sort(win.reshape(-1))[(kk - 1) // 2]
    return out


if __name__ == "__main__":
    # 1) Module defaults: kernel_size=3, stride=1, padding=0, same=False.
    x1 = jax.random.normal(jax.random.PRNGKey(0), (2, 4, 16, 16), dtype=jnp.float32)
    y1 = jax.block_until_ready(median_pool2d(x1))
    ref1 = _reference_median_pool(np.asarray(x1))
    assert y1.shape == ref1.shape, (y1.shape, ref1.shape)
    np.testing.assert_array_equal(np.asarray(y1), ref1)

    # 2) 'same' reflect padding with odd plane sizes (lane-pack + reflect path).
    x2 = jax.random.normal(jax.random.PRNGKey(1), (1, 3, 15, 13), dtype=jnp.float32)
    y2 = jax.block_until_ready(median_pool2d(x2, kernel_size=3, stride=1, same=True))
    ref2 = _reference_median_pool(np.asarray(x2), kernel_size=3, stride=1, same=True)
    assert y2.shape == ref2.shape, (y2.shape, ref2.shape)
    np.testing.assert_array_equal(np.asarray(y2), ref2)

    # 3) 5x5 window, stride 2, explicit padding (general network + strided path).
    x3 = jax.random.normal(jax.random.PRNGKey(2), (1, 2, 18, 20), dtype=jnp.float32)
    y3 = jax.block_until_ready(median_pool2d(x3, kernel_size=5, stride=2, padding=2))
    ref3 = _reference_median_pool(np.asarray(x3), kernel_size=5, stride=2, padding=2)
    assert y3.shape == ref3.shape, (y3.shape, ref3.shape)
    np.testing.assert_array_equal(np.asarray(y3), ref3)

    print("KERNEL_OK")
</pallas_src>

<mosaic_0001>
module attributes {stable_mosaic.version = 11 : i64} {
  func.func @_median_pool_kernel(%arg0: i32, %arg1: memref<1x16x130xf32, #tpu.memory_space<vmem>>, %arg2: memref<1x14x128xf32, #tpu.memory_space<vmem>>) attributes {dimension_semantics = [#tpu.dimension_semantics<parallel>], iteration_bounds = array<i64: 1>, scalar_prefetch = 0 : i64, scratch_operands = 0 : i64, tpu.core_type = #tpu.core_type<tc>, window_params = [{transform_indices = @transform_0, window_bounds = array<i64: 1, 16, 130>}, {transform_indices = @transform_1, window_bounds = array<i64: 1, 14, 128>}]} {
    %c0 = arith.constant 0 : index
    %c0_0 = arith.constant 0 : index
    %c0_1 = arith.constant 0 : index
    %0 = vector.load %arg1[%c0, %c0_0, %c0_1] : memref<1x16x130xf32, #tpu.memory_space<vmem>>, vector<1x16x130xf32>
    %1 = vector.extract_strided_slice %0 {offsets = [0, 0, 0], sizes = [1, 16, 128], strides = [1, 1, 1]} : vector<1x16x130xf32> to vector<1x16x128xf32>
    %2 = vector.extract_strided_slice %0 {offsets = [0, 0, 1], sizes = [1, 16, 128], strides = [1, 1, 1]} : vector<1x16x130xf32> to vector<1x16x128xf32>
    %3 = vector.extract_strided_slice %0 {offsets = [0, 0, 2], sizes = [1, 16, 128], strides = [1, 1, 1]} : vector<1x16x130xf32> to vector<1x16x128xf32>
    %4 = arith.minimumf %1, %2 : vector<1x16x128xf32>
    %5 = arith.maximumf %1, %2 : vector<1x16x128xf32>
    %6 = arith.minimumf %4, %3 : vector<1x16x128xf32>
    %7 = arith.maximumf %5, %3 : vector<1x16x128xf32>
    %8 = arith.maximumf %4, %3 : vector<1x16x128xf32>
    %9 = arith.minimumf %5, %8 : vector<1x16x128xf32>
    %10 = vector.extract_strided_slice %6 {offsets = [0, 0, 0], sizes = [1, 14, 128], strides = [1, 1, 1]} : vector<1x16x128xf32> to vector<1x14x128xf32>
    %11 = vector.extract_strided_slice %6 {offsets = [0, 1, 0], sizes = [1, 14, 128], strides = [1, 1, 1]} : vector<1x16x128xf32> to vector<1x14x128xf32>
    %12 = arith.maximumf %10, %11 : vector<1x14x128xf32>
    %13 = vector.extract_strided_slice %6 {offsets = [0, 2, 0], sizes = [1, 14, 128], strides = [1, 1, 1]} : vector<1x16x128xf32> to vector<1x14x128xf32>
    %14 = arith.maximumf %12, %13 : vector<1x14x128xf32>
    %15 = vector.extract_strided_slice %7 {offsets = [0, 0, 0], sizes = [1, 14, 128], strides = [1, 1, 1]} : vector<1x16x128xf32> to vector<1x14x128xf32>
    %16 = vector.extract_strided_slice %7 {offsets = [0, 1, 0], sizes = [1, 14, 128], strides = [1, 1, 1]} : vector<1x16x128xf32> to vector<1x14x128xf32>
    %17 = arith.minimumf %15, %16 : vector<1x14x128xf32>
    %18 = vector.extract_strided_slice %7 {offsets = [0, 2, 0], sizes = [1, 14, 128], strides = [1, 1, 1]} : vector<1x16x128xf32> to vector<1x14x128xf32>
    %19 = arith.minimumf %17, %18 : vector<1x14x128xf32>
    %20 = vector.extract_strided_slice %9 {offsets = [0, 0, 0], sizes = [1, 14, 128], strides = [1, 1, 1]} : vector<1x16x128xf32> to vector<1x14x128xf32>
    %21 = vector.extract_strided_slice %9 {offsets = [0, 1, 0], sizes = [1, 14, 128], strides = [1, 1, 1]} : vector<1x16x128xf32> to vector<1x14x128xf32>
    %22 = vector.extract_strided_slice %9 {offsets = [0, 2, 0], sizes = [1, 14, 128], strides = [1, 1, 1]} : vector<1x16x128xf32> to vector<1x14x128xf32>
    %23 = arith.minimumf %20, %21 : vector<1x14x128xf32>
    %24 = arith.maximumf %20, %21 : vector<1x14x128xf32>
    %25 = arith.minimumf %24, %22 : vector<1x14x128xf32>
    %26 = arith.maximumf %23, %25 : vector<1x14x128xf32>
    %27 = arith.minimumf %14, %26 : vector<1x14x128xf32>
    %28 = arith.maximumf %14, %26 : vector<1x14x128xf32>
    %29 = arith.minimumf %28, %19 : vector<1x14x128xf32>
    %30 = arith.maximumf %27, %29 : vector<1x14x128xf32>
    %c0_2 = arith.constant 0 : index
    %c0_3 = arith.constant 0 : index
    %c0_4 = arith.constant 0 : index
    %31 = vector.load %arg2[%c0_2, %c0_3, %c0_4] : memref<1x14x128xf32, #tpu.memory_space<vmem>>, vector<1x14x128xf32>
    tpu.vector_store %arg2[%c0_2, %c0_3, %c0_4], %30 {strides = array<i32>} : memref<1x14x128xf32, #tpu.memory_space<vmem>>, vector<1x14x128xf32>,
    return
  }
  func.func @transform_0(%arg0: i32) -> (i32, i32, i32) {
    %c0_i32 = arith.constant 0 : i32
    %c0_i32_0 = arith.constant 0 : i32
    %c0_i32_1 = arith.constant 0 : i32
    return %arg0, %c0_i32, %c0_i32_0 : i32, i32, i32
  }
  func.func @transform_1(%arg0: i32) -> (i32, i32, i32) {
    %c0_i32 = arith.constant 0 : i32
    %c0_i32_0 = arith.constant 0 : i32
    %c0_i32_1 = arith.constant 0 : i32
    return %arg0, %c0_i32, %c0_i32_0 : i32, i32, i32
  }
}

</mosaic_0001>

<llo_original>
// kernel: tpu_custom_call.1
$region0: #{tpu_custom_call.1}
  #allocation0 [shape = 'u32[]', space=smem, size = 0x4, offset = 0x4, fixed_abs, tag = 'smem constant byte address 0x4 - core index']
  #allocation1 [shape = 'u32[144,128]{1,0:T(1,128)}', space=vmem, size = 0x12000, scoped, tag = 'internal scratch']
  %s0 = inlined_call_operand.hbm [shape: f32[1,16,130], index: 0, kind: input, shape index: {}]
  %s1 = inlined_call_operand.vmem [shape: f32[1,14,128], index: 1, kind: output, shape index: {}]
  %s2 = sld [smem:[#allocation0]]
  $region18: #{tpu_custom_call.1} parent=0
    _
  %s4 = ssub.s32 1, %s2
  %s5 = scalar_select 0, %s4, %s2
  $region1: #{tpu_custom_call.1} parent=0
    #allocation2 [shape = 'u8[16384]{0}', space=vmem, size = 0x4000, scoped, tag = 'input window, operand 0, single buffered']
    #allocation3 [shape = 's32[1]{0}', space=sflag, size = 0x4, scoped, tag = 'scoped memory for tpu_custom_call.1']
    %6 = vsyncpa [#allocation3], 0
    // Predicated region
    $region2: #{tpu_custom_call.1} parent=1 // pred_check
      _
    $region3: #{tpu_custom_call.1} parent=1 // pred_check_branch
      %8 = sbr.rel (0) target = $region5
    $region4: #{tpu_custom_call.1} parent=1 // pred_region
      %s10 = ssub.s32 512, 512
      %11 = vsyncadd [#allocation3], %s10
      %s12 = sshll.u32 [#allocation2], 4
      %s13 = int_to_ptr.vmem [resolvable:$true] %s12
      %18 = dma.hbm_to_vmem [thread:$0]  %s0, 512, %s13, [#allocation3], 256, 256, 16
    $region5: #{tpu_custom_call.1} parent=1 // pred_fallthru
      _
    // Predicated region
    $region6: #{tpu_custom_call.1} parent=1 // pred_check
      _
    $region7: #{tpu_custom_call.1} parent=1 // pred_check_branch
      %20 = sbr.rel (0) target = $region9
    $region8: #{tpu_custom_call.1} parent=1 // pred_region
      %21 = dma.done [#allocation3], 512
    $region9: #{tpu_custom_call.1} parent=1 // pred_fallthru
      _
    %v22 = vld [vmem:[#allocation2] sm:$0xff]
    %v23 = vld [vmem:[#allocation2 + $0x8] sm:$0xff]
    %v24 = vld [vmem:[#allocation2 + $0x10] sm:$0xff]
    %v25 = vld [vmem:[#allocation2 + $0x18] sm:$0xff]
    %30 = vrot.lane.b32.xlu0 %v22, 127
    %v31 = vpop.permute.xlu0 %30
    %32 = vrot.lane.b32.xlu0 %v23, 127
    %v33 = vpop.permute.xlu0 %32
    %34 = vrot.lane.b32.xlu0 %v24, 127
    %v35 = vpop.permute.xlu0 %34
    %36 = vrot.lane.b32.xlu0 %v25, 127
    %v37 = vpop.permute.xlu0 %36
    %vm38 = vcmask 1039360
    %v39 = vsel %vm38, %v31, %v33
    %v40 = vsel %vm38, %v35, %v37
    %v43 = vmin.f32 %v22, %v39
    %v44 = vmin.f32 %v24, %v40
    %v45 = vmax.f32 %v22, %v39
    %v46 = vmax.f32 %v24, %v40
    %47 = vrot.lane.b32.xlu0 %v22, 126
    %v48 = vpop.permute.xlu0 %47
    %49 = vrot.lane.b32.xlu0 %v23, 126
    %v50 = vpop.permute.xlu0 %49
    %51 = vrot.lane.b32.xlu0 %v24, 126
    %v52 = vpop.permute.xlu0 %51
    %53 = vrot.lane.b32.xlu0 %v25, 126
    %v54 = vpop.permute.xlu0 %53
    %vm55 = vcmask 1031168
    %v56 = vsel %vm55, %v48, %v50
    %v57 = vsel %vm55, %v52, %v54
    %v60 = vmin.f32 %v43, %v56
    %v61 = vmin.f32 %v44, %v57
    %v62 = vmax.f32 %v45, %v56
    %v63 = vmax.f32 %v46, %v57
    %v64 = vmax.f32 %v43, %v56
    %v65 = vmax.f32 %v44, %v57
    %v66 = vmin.f32 %v45, %v64
    %v67 = vmin.f32 %v46, %v65
    %vm70 = vcmask 1046528
    %v71 = vrot.slane %v60, 1
    %v72 = vrot.slane %v61, 1
    %v73 = vsel %vm70, %v71, %v72
    %v76 = vmax.f32 %v60, %v73
    %v77 = vmax.f32 %v61, %v72
    %vm78 = vcmask 1045504
    %v79 = vrot.slane %v60, 2
    %v80 = vrot.slane %v61, 2
    %v81 = vsel %vm78, %v79, %v80
    %v84 = vmax.f32 %v76, %v81
    %v85 = vmax.f32 %v77, %v80
    %v88 = vrot.slane %v62, 1
    %v89 = vrot.slane %v63, 1
    %v90 = vsel %vm70, %v88, %v89
    %v93 = vmin.f32 %v62, %v90
    %v94 = vmin.f32 %v63, %v89
    %v95 = vrot.slane %v62, 2
    %v96 = vrot.slane %v63, 2
    %v97 = vsel %vm78, %v95, %v96
    %v100 = vmin.f32 %v93, %v97
    %v101 = vmin.f32 %v94, %v96
    %v104 = vrot.slane %v66, 1
    %v105 = vrot.slane %v67, 1
    %v106 = vsel %vm70, %v104, %v105
    %v109 = vmin.f32 %v66, %v106
    %v110 = vmin.f32 %v67, %v105
    %v111 = vmax.f32 %v66, %v106
    %v112 = vmax.f32 %v67, %v105
    %v113 = vrot.slane %v66, 2
    %v114 = vrot.slane %v67, 2
    %v115 = vsel %vm78, %v113, %v114
    %v118 = vmin.f32 %v111, %v115
    %v119 = vmin.f32 %v112, %v114
    %v120 = vmax.f32 %v109, %v118
    %v121 = vmax.f32 %v110, %v119
    %v122 = vmin.f32 %v84, %v120
    %v123 = vmin.f32 %v85, %v121
    %v124 = vmax.f32 %v84, %v120
    %v125 = vmax.f32 %v85, %v121
    %v126 = vmin.f32 %v124, %v100
    %v127 = vmin.f32 %v125, %v101
    %v128 = vmax.f32 %v122, %v126
    %v129 = vmax.f32 %v123, %v127
    %130 = vst [vmem:[%s1] sm:$0xff] %v128
    %131 = vst [vmem:[%s1 + $0x8] sm:$0x3f] %v129
    // Predicated region
    $region10: #{tpu_custom_call.1} parent=1 // pred_check
      _
    $region11: #{tpu_custom_call.1} parent=1 // pred_check_branch
      %133 = sbr.rel (0) target = $region13
    $region12: #{tpu_custom_call.1} parent=1 // pred_region
      _
    $region13: #{tpu_custom_call.1} parent=1 // pred_fallthru
      _
    // Predicated region
    $region14: #{tpu_custom_call.1} parent=1 // pred_check
      _
    $region15: #{tpu_custom_call.1} parent=1 // pred_check_branch
      %135 = sbr.rel (0) target = $region17
    $region16: #{tpu_custom_call.1} parent=1 // pred_region
      _
    $region17: #{tpu_custom_call.1} parent=1 // pred_fallthru
      _
    %136 = vsyncpa [#allocation3], 1

</llo_original>
